<compile_context>
chip_gen: v7x
topology: tpu7x:2x2x1
jax: 0.10.0
libtpu: 0.0.40
codegen_flags: <defaults>
</compile_context>

<pallas_src>
import functools

import jax
import jax.numpy as jnp
from jax.experimental import pallas as pl
from jax.experimental.pallas import tpu as pltpu


# ---------------------------------------------------------------------------
# Kernel 1 (parallel over time): pre[t] = x[t] @ W_ih^T + (b_ih + b_hh)
# ---------------------------------------------------------------------------
def _input_proj_kernel(x_ref, wihT_ref, b_ref, pre_ref):
    tt, b, i = x_ref.shape
    x2 = x_ref[...].reshape(tt * b, i)                         # (Tt*B, I)
    pre = jnp.dot(x2, wihT_ref[...],
                  preferred_element_type=jnp.float32) + b_ref[...]
    pre_ref[...] = pre.reshape(tt, b, -1).astype(pre_ref.dtype)


# ---------------------------------------------------------------------------
# Kernel 2 (sequential in time): LSTM recurrence, Tt timesteps per grid step.
# ---------------------------------------------------------------------------
def _lstm_recurrent_kernel(pre_ref, whhT_ref, h0_ref, c0_ref,
                           h_out_ref, hN_ref, cN_ref,
                           h_scr, c_scr, *, hidden_size, t_block):
    tb = pl.program_id(0)

    @pl.when(tb == 0)
    def _():
        h_scr[...] = h0_ref[...].astype(jnp.float32)
        c_scr[...] = c0_ref[...].astype(jnp.float32)

    H = hidden_size

    def step(i, carry):
        h_prev = h_scr[...]                                    # (B, H) f32
        c_prev = c_scr[...]                                    # (B, H) f32
        # Single small matmul on the serial path: h_{t-1} @ W_hh^T.
        gates = pre_ref[i] + jnp.dot(h_prev, whhT_ref[...],
                                     preferred_element_type=jnp.float32)
        # NOTE: for H a multiple of 128 these gate slices are whole vreg tiles.
        i_g = jax.nn.sigmoid(gates[:, 0 * H:1 * H])
        f_g = jax.nn.sigmoid(gates[:, 1 * H:2 * H])
        g_g = jnp.tanh(gates[:, 2 * H:3 * H])
        o_g = jax.nn.sigmoid(gates[:, 3 * H:4 * H])
        c_new = f_g * c_prev + i_g * g_g
        h_new = o_g * jnp.tanh(c_new)
        h_scr[...] = h_new
        c_scr[...] = c_new
        h_out_ref[i] = h_new.astype(h_out_ref.dtype)           # one store per step
        return carry

    jax.lax.fori_loop(0, t_block, step, 0, unroll=True)

    @pl.when(tb == pl.num_programs(0) - 1)
    def _():
        hN_ref[...] = h_scr[...].astype(hN_ref.dtype)
        cN_ref[...] = c_scr[...].astype(cN_ref.dtype)


def _pick_block(total, target):
    blk = max(1, min(total, target))
    while total % blk != 0:
        blk -= 1
    return blk


def rnn_layer_forward(x, prev_state, params, *, res_link=True,
                      proj_t_block=32, rec_t_block=16):
    """Training-path forward of RNNLayer (inference=False).

    x          : (T, B, I) float32
    prev_state : (h0, c0), each (B, H) float32
    params     : dict with w_ih (4H, I), w_hh (4H, H), b_ih (4H,), b_hh (4H,)
    returns    : {'output': (T,B,H), 'next_state': (h,c), 'hidden_state': (T,B,H)}
    """
    T, B, I = x.shape
    H = params["w_hh"].shape[1]
    h0, c0 = prev_state

    # Pre-transpose / pack weights once at trace time.
    wihT = params["w_ih"].T                                    # (I, 4H)
    whhT = params["w_hh"].T                                    # (H, 4H)
    bias = (params["b_ih"] + params["b_hh"]).reshape(1, 4 * H)

    # ---- parallel input projection: (T, B, I) -> (T, B, 4H) ----
    tp = _pick_block(T, proj_t_block)
    pre = pl.pallas_call(
        _input_proj_kernel,
        out_shape=jax.ShapeDtypeStruct((T, B, 4 * H), jnp.float32),
        grid_spec=pltpu.PrefetchScalarGridSpec(
            num_scalar_prefetch=0,
            grid=(T // tp,),
            in_specs=[
                pl.BlockSpec((tp, B, I), lambda t: (t, 0, 0)),       # x tile
                pl.BlockSpec((I, 4 * H), lambda t: (0, 0)),          # W_ih^T
                pl.BlockSpec((1, 4 * H), lambda t: (0, 0)),          # bias
            ],
            out_specs=pl.BlockSpec((tp, B, 4 * H), lambda t: (t, 0, 0)),
        ),
        compiler_params=pltpu.CompilerParams(
            dimension_semantics=("parallel",)),
    )(x, wihT, bias)

    # ---- sequential recurrence over time tiles ----
    tr = _pick_block(T, rec_t_block)
    kernel = functools.partial(_lstm_recurrent_kernel, hidden_size=H, t_block=tr)
    hidden_state, h_n, c_n = pl.pallas_call(
        kernel,
        out_shape=(
            jax.ShapeDtypeStruct((T, B, H), x.dtype),                # hidden_state
            jax.ShapeDtypeStruct((B, H), x.dtype),                   # h_N
            jax.ShapeDtypeStruct((B, H), x.dtype),                   # c_N
        ),
        grid_spec=pltpu.PrefetchScalarGridSpec(
            num_scalar_prefetch=0,
            grid=(T // tr,),
            in_specs=[
                pl.BlockSpec((tr, B, 4 * H), lambda t: (t, 0, 0)),   # pre-activations
                pl.BlockSpec((H, 4 * H), lambda t: (0, 0)),          # W_hh^T
                pl.BlockSpec((B, H), lambda t: (0, 0)),              # h0
                pl.BlockSpec((B, H), lambda t: (0, 0)),              # c0
            ],
            out_specs=[
                pl.BlockSpec((tr, B, H), lambda t: (t, 0, 0)),       # hidden_state
                pl.BlockSpec((B, H), lambda t: (0, 0)),              # h_N (resident)
                pl.BlockSpec((B, H), lambda t: (0, 0)),              # c_N (resident)
            ],
            scratch_shapes=[
                pltpu.VMEM((B, H), jnp.float32),                     # h carry
                pltpu.VMEM((B, H), jnp.float32),                     # c carry
            ],
        ),
        compiler_params=pltpu.CompilerParams(
            dimension_semantics=("arbitrary",)),                     # sequential time
    )(pre, whhT, h0, c0)

    # Residual link applied in the (memory-bound, parallel) wrapper pass, not
    # inside the serial loop.
    output = hidden_state + x if res_link else hidden_state
    return {"output": output, "next_state": (h_n, c_n), "hidden_state": hidden_state}


def _reference_forward(x, prev_state, params, *, res_link=True):
    """Pure-JAX reference matching torch nn.LSTM + RNNLayer semantics."""
    H = params["w_hh"].shape[1]
    w_ih, w_hh = params["w_ih"], params["w_hh"]
    b = params["b_ih"] + params["b_hh"]

    def step(carry, x_t):
        h, c = carry
        gates = x_t @ w_ih.T + h @ w_hh.T + b
        i = jax.nn.sigmoid(gates[:, 0 * H:1 * H])
        f = jax.nn.sigmoid(gates[:, 1 * H:2 * H])
        g = jnp.tanh(gates[:, 2 * H:3 * H])
        o = jax.nn.sigmoid(gates[:, 3 * H:4 * H])
        c_new = f * c + i * g
        h_new = o * jnp.tanh(c_new)
        return (h_new, c_new), h_new

    (h_n, c_n), hs = jax.lax.scan(step, prev_state, x)
    out = hs + x if res_link else hs
    return {"output": out, "next_state": (h_n, c_n), "hidden_state": hs}


if __name__ == "__main__":
    T, B, I, H = 8, 8, 32, 32   # res_link requires I == H

    key = jax.random.PRNGKey(0)
    k_x, k_h, k_c, k1, k2, k3, k4 = jax.random.split(key, 7)

    x = jax.random.normal(k_x, (T, B, I), dtype=jnp.float32)
    h0 = jax.random.normal(k_h, (B, H), dtype=jnp.float32)
    c0 = jax.random.normal(k_c, (B, H), dtype=jnp.float32)

    scale = 1.0 / jnp.sqrt(jnp.float32(H))   # torch nn.LSTM default init range
    params = {
        "w_ih": jax.random.uniform(k1, (4 * H, I), jnp.float32, -scale, scale),
        "w_hh": jax.random.uniform(k2, (4 * H, H), jnp.float32, -scale, scale),
        "b_ih": jax.random.uniform(k3, (4 * H,), jnp.float32, -scale, scale),
        "b_hh": jax.random.uniform(k4, (4 * H,), jnp.float32, -scale, scale),
    }

    result = rnn_layer_forward(x, (h0, c0), params, res_link=True)
    jax.block_until_ready(result)

    ref = _reference_forward(x, (h0, c0), params, res_link=True)
    assert jnp.allclose(result["output"], ref["output"], atol=1e-5)
    assert jnp.allclose(result["hidden_state"], ref["hidden_state"], atol=1e-5)
    assert jnp.allclose(result["next_state"][0], ref["next_state"][0], atol=1e-5)
    assert jnp.allclose(result["next_state"][1], ref["next_state"][1], atol=1e-5)

    print("KERNEL_OK")
</pallas_src>

<mosaic_0001>
module attributes {stable_mosaic.version = 11 : i64} {
  func.func @_input_proj_kernel(%arg0: i32, %arg1: memref<8x8x32xf32, #tpu.memory_space<vmem>>, %arg2: memref<32x128xf32, #tpu.memory_space<vmem>>, %arg3: memref<1x128xf32, #tpu.memory_space<vmem>>, %arg4: memref<8x8x128xf32, #tpu.memory_space<vmem>>) attributes {dimension_semantics = [#tpu.dimension_semantics<parallel>], iteration_bounds = array<i64: 1>, scalar_prefetch = 0 : i64, scratch_operands = 0 : i64, tpu.core_type = #tpu.core_type<tc>, window_params = [{transform_indices = @transform_0, window_bounds = array<i64: 8, 8, 32>}, {pipeline_mode = #tpu.pipeline_mode<synchronous>, transform_indices = @transform_1, window_bounds = array<i64: 32, 128>}, {pipeline_mode = #tpu.pipeline_mode<synchronous>, transform_indices = @transform_2, window_bounds = array<i64: 1, 128>}, {transform_indices = @transform_3, window_bounds = array<i64: 8, 8, 128>}]} {
    %c0 = arith.constant 0 : index
    %c0_0 = arith.constant 0 : index
    %c0_1 = arith.constant 0 : index
    %0 = vector.load %arg1[%c0, %c0_0, %c0_1] : memref<8x8x32xf32, #tpu.memory_space<vmem>>, vector<8x8x32xf32>
    %1 = vector.shape_cast %0 : vector<8x8x32xf32> to vector<64x32xf32>
    %c0_2 = arith.constant 0 : index
    %c0_3 = arith.constant 0 : index
    %2 = vector.load %arg2[%c0_2, %c0_3] : memref<32x128xf32, #tpu.memory_space<vmem>>, vector<32x128xf32>
    %cst = arith.constant dense<0.000000e+00> : vector<64x128xf32>
    %3 = tpu.matmul %1, %2, %cst {dimension_numbers = #tpu.dot_dimension_numbers<[1], [0], [0], [1], [0, 0, 1, 1], [], []>} : vector<64x32xf32>, vector<32x128xf32>, vector<64x128xf32> -> vector<64x128xf32>
    %c0_4 = arith.constant 0 : index
    %c0_5 = arith.constant 0 : index
    %4 = vector.load %arg3[%c0_4, %c0_5] : memref<1x128xf32, #tpu.memory_space<vmem>>, vector<1x128xf32>
    %5 = vector.broadcast %4 : vector<1x128xf32> to vector<64x128xf32>
    %6 = arith.addf %3, %5 : vector<64x128xf32>
    %7 = vector.shape_cast %6 : vector<64x128xf32> to vector<8x8x128xf32>
    %c0_6 = arith.constant 0 : index
    %c0_7 = arith.constant 0 : index
    %c0_8 = arith.constant 0 : index
    %8 = vector.load %arg4[%c0_6, %c0_7, %c0_8] : memref<8x8x128xf32, #tpu.memory_space<vmem>>, vector<8x8x128xf32>
    tpu.vector_store %arg4[%c0_6, %c0_7, %c0_8], %7 {strides = array<i32>} : memref<8x8x128xf32, #tpu.memory_space<vmem>>, vector<8x8x128xf32>,
    return
  }
  func.func @transform_0(%arg0: i32) -> (i32, i32, i32) {
    %c0_i32 = arith.constant 0 : i32
    %c0_i32_0 = arith.constant 0 : i32
    %c0_i32_1 = arith.constant 0 : i32
    return %arg0, %c0_i32, %c0_i32_0 : i32, i32, i32
  }
  func.func @transform_1(%arg0: i32) -> (i32, i32) {
    %c0_i32 = arith.constant 0 : i32
    %c0_i32_0 = arith.constant 0 : i32
    %c0_i32_1 = arith.constant 0 : i32
    return %c0_i32, %c0_i32_0 : i32, i32
  }
  func.func @transform_2(%arg0: i32) -> (i32, i32) {
    %c0_i32 = arith.constant 0 : i32
    %c0_i32_0 = arith.constant 0 : i32
    %c0_i32_1 = arith.constant 0 : i32
    return %c0_i32, %c0_i32_0 : i32, i32
  }
  func.func @transform_3(%arg0: i32) -> (i32, i32, i32) {
    %c0_i32 = arith.constant 0 : i32
    %c0_i32_0 = arith.constant 0 : i32
    %c0_i32_1 = arith.constant 0 : i32
    return %arg0, %c0_i32, %c0_i32_0 : i32, i32, i32
  }
}

</mosaic_0001>

<llo_original>
// kernel: tpu_custom_call.1
$region0: #{tpu_custom_call.1}
  #allocation0 [shape = 'u32[]', space=smem, size = 0x4, offset = 0x4, fixed_abs, tag = 'smem constant byte address 0x4 - core index']
  #allocation1 [shape = 'u32[144,128]{1,0:T(1,128)}', space=vmem, size = 0x12000, scoped, tag = 'internal scratch']
  %s0 = inlined_call_operand.hbm [shape: f32[8,8,32], index: 0, kind: input, shape index: {}]
  %s1 = inlined_call_operand.hbm [shape: f32[32,128], index: 1, kind: input, shape index: {}]
  %s2 = inlined_call_operand.vmem [shape: f32[1,128], index: 2, kind: input, shape index: {}]
  %s3 = inlined_call_operand.hbm [shape: f32[8,8,128], index: 3, kind: output, shape index: {}]
  %s4 = sld [smem:[#allocation0]]
  $region30: #{tpu_custom_call.1} parent=0
    _
  %s6 = ssub.s32 1, %s4
  %s7 = scalar_select 0, %s6, %s4
  $region1: #{tpu_custom_call.1} parent=0
    #allocation2 [shape = 'u8[32768]{0}', space=vmem, size = 0x8000, scoped, tag = 'input window, operand 0, single buffered']
    #allocation3 [shape = 's32[1]{0}', space=sflag, size = 0x4, scoped, tag = 'scoped memory for tpu_custom_call.1']
    #allocation4 [shape = 's32[1]{0}', space=sflag, size = 0x4, scoped, tag = 'scoped memory for tpu_custom_call.1']
    #allocation5 [shape = 'u8[16384]{0}', space=vmem, size = 0x4000, scoped, tag = 'input window, operand 1, single buffered']
    #allocation6 [shape = 's32[1]{0}', space=sflag, size = 0x4, scoped, tag = 'scoped memory for tpu_custom_call.1']
    #allocation7 [shape = 'u8[32768]{0}', space=vmem, size = 0x8000, scoped, tag = 'output window, operand 0, single buffered']
    %8 = vsyncpa [#allocation3], 0
    %9 = vsyncpa [#allocation6], 0
    %10 = vsyncpa [#allocation4], 0
    // Predicated region
    $region2: #{tpu_custom_call.1} parent=1 // pred_check
      _
    $region3: #{tpu_custom_call.1} parent=1 // pred_check_branch
      %12 = sbr.rel (0) target = $region5
    $region4: #{tpu_custom_call.1} parent=1 // pred_region
      %s14 = ssub.s32 1024, 1024
      %15 = vsyncadd [#allocation3], %s14
      %s16 = sshll.u32 [#allocation2], 4
      %s17 = int_to_ptr.vmem [resolvable:$true] %s16
      %22 = dma.hbm_to_vmem [thread:$0]  %s0, 1024, %s17, [#allocation3], 128, 128, 8
    $region5: #{tpu_custom_call.1} parent=1 // pred_fallthru
      _
    // Predicated region
    $region6: #{tpu_custom_call.1} parent=1 // pred_check
      _
    $region7: #{tpu_custom_call.1} parent=1 // pred_check_branch
      %24 = sbr.rel (0) target = $region9
    $region8: #{tpu_custom_call.1} parent=1 // pred_region
      %s26 = ssub.s32 512, 512
      %27 = vsyncadd [#allocation6], %s26
      %s28 = sshll.u32 [#allocation5], 4
      %s29 = int_to_ptr.vmem [resolvable:$true] %s28
      %34 = dma.hbm_to_vmem [thread:$0]  %s1, 512, %s29, [#allocation6], 128, 128, 8
    $region9: #{tpu_custom_call.1} parent=1 // pred_fallthru
      _
    // Predicated region
    $region10: #{tpu_custom_call.1} parent=1 // pred_check
      _
    $region11: #{tpu_custom_call.1} parent=1 // pred_check_branch
      %36 = sbr.rel (0) target = $region13
    $region12: #{tpu_custom_call.1} parent=1 // pred_region
      _
    $region13: #{tpu_custom_call.1} parent=1 // pred_fallthru
      _
    // Predicated region
    $region14: #{tpu_custom_call.1} parent=1 // pred_check
      _
    $region15: #{tpu_custom_call.1} parent=1 // pred_check_branch
      %38 = sbr.rel (0) target = $region17
    $region16: #{tpu_custom_call.1} parent=1 // pred_region
      %39 = dma.done [#allocation3], 1024
    $region17: #{tpu_custom_call.1} parent=1 // pred_fallthru
      _
    // Predicated region
    $region18: #{tpu_custom_call.1} parent=1 // pred_check
      _
    $region19: #{tpu_custom_call.1} parent=1 // pred_check_branch
      %41 = sbr.rel (0) target = $region21
    $region20: #{tpu_custom_call.1} parent=1 // pred_region
      %42 = dma.done [#allocation6], 512
    $region21: #{tpu_custom_call.1} parent=1 // pred_fallthru
      _
    %v43 = vld [vmem:[#allocation2] sm:$0xff]
    %v44 = vld [vmem:[#allocation2 + $0x8] sm:$0xff]
    %v45 = vld [vmem:[#allocation2 + $0x10] sm:$0xff]
    %v46 = vld [vmem:[#allocation2 + $0x18] sm:$0xff]
    %v47 = vld [vmem:[#allocation2 + $0x20] sm:$0xff]
    %v48 = vld [vmem:[#allocation2 + $0x28] sm:$0xff]
    %v49 = vld [vmem:[#allocation2 + $0x30] sm:$0xff]
    %v50 = vld [vmem:[#allocation2 + $0x38] sm:$0xff]
    %v51 = vld [vmem:[#allocation5] sm:$0xff]
    %v52 = vld [vmem:[#allocation5 + $0x8] sm:$0xff]
    %v53 = vld [vmem:[#allocation5 + $0x10] sm:$0xff]
    %v54 = vld [vmem:[#allocation5 + $0x18] sm:$0xff]
    %v55 = vld [vmem:[%s2] sm:$0x1]
    %v57 = vlaneseq
    %v58 = vshrl.u32 %v57, 7
    %v59 = vsub.s32 0, %v58
    %v60 = vrot.slane %v55, %v59
    %vm62 = vcmask 261120
    %v64 = vsel %vm62, %v43, 0
    %v67 = vsel %vm62, %v44, 0
    %v70 = vsel %vm62, %v45, 0
    %v73 = vsel %vm62, %v46, 0
    %v76 = vsel %vm62, %v47, 0
    %v79 = vsel %vm62, %v48, 0
    %v82 = vsel %vm62, %v49, 0
    %v85 = vsel %vm62, %v50, 0
    %87 = vmatprep.subr.mxu0 0.0
    %88 = vmatpush1.msra.mxu0 %v51
    %89 = vmatprep.subr.mxu0 0.0
    %90 = vmatpush1.msra.mxu0 %v52
    %91 = vmatprep.subr.mxu0 0.0
    %92 = vmatpush1.msra.mxu0 %v53
    %93 = vmatprep.subr.mxu0 0.0
    %94 = vmatpush1.msra.mxu0 %v54
    %95 = vmatprep.subr.mxu0 0.0
    %96 = vmatpush1.msra.mxu0 0.0
    %97 = vmatprep.subr.mxu0 0.0
    %98 = vmatpush1.msra.mxu0 0.0
    %99 = vmatprep.subr.mxu0 0.0
    %100 = vmatpush1.msra.mxu0 0.0
    %101 = vmatprep.subr.mxu0 0.0
    %102 = vmatpush1.msra.mxu0 0.0
    %103 = vmatprep.subr.mxu0 0.0
    %104 = vmatpush1.msra.mxu0 0.0
    %105 = vmatprep.subr.mxu0 0.0
    %106 = vmatpush1.msra.mxu0 0.0
    %107 = vmatprep.subr.mxu0 0.0
    %108 = vmatpush1.msra.mxu0 0.0
    %109 = vmatprep.subr.mxu0 0.0
    %110 = vmatpush1.msra.mxu0 0.0
    %111 = vmatprep.subr.mxu0 0.0
    %112 = vmatpush1.msra.mxu0 0.0
    %113 = vmatprep.subr.mxu0 0.0
    %114 = vmatpush1.msra.mxu0 0.0
    %115 = vmatprep.subr.mxu0 0.0
    %116 = vmatpush1.msra.mxu0 0.0
    %117 = vmatprep.subr.mxu0 0.0
    %118 = vmatpush1.msra.mxu0 0.0
    %119 = vmatprep.subr.mxu0 0.0
    %120 = vmatpush1.msra.mxu0 0.0
    %121 = vmatprep.subr.mxu0 0.0
    %122 = vmatpush1.msra.mxu0 0.0
    %123 = vmatprep.subr.mxu0 0.0
    %124 = vmatpush1.msra.mxu0 0.0
    %125 = vmatprep.subr.mxu0 0.0
    %126 = vmatpush1.msra.mxu0 0.0
    %127 = vmatprep.subr.mxu0 0.0
    %128 = vmatpush1.msra.mxu0 0.0
    %129 = vmatprep.subr.mxu0 0.0
    %130 = vmatpush1.msra.mxu0 0.0
    %131 = vmatprep.subr.mxu0 0.0
    %132 = vmatpush1.msra.mxu0 0.0
    %133 = vmatprep.subr.mxu0 0.0
    %134 = vmatpush1.msra.mxu0 0.0
    %135 = vmatprep.subr.mxu0 0.0
    %136 = vmatpush1.msra.mxu0 0.0
    %137 = vmatprep.subr.mxu0 0.0
    %138 = vmatpush1.msra.mxu0 0.0
    %139 = vmatprep.subr.mxu0 0.0
    %140 = vmatpush1.msra.mxu0 0.0
    %141 = vmatprep.subr.mxu0 0.0
    %142 = vmatpush1.msra.mxu0 0.0
    %143 = vmatprep.subr.mxu0 0.0
    %144 = vmatpush1.msra.mxu0 0.0
    %145 = vmatprep.subr.mxu0 0.0
    %146 = vmatpush1.msra.mxu0 0.0
    %147 = vmatprep.subr.mxu0 0.0
    %148 = vmatpush1.msra.mxu0 0.0
    %149 = vmatprep.subr.mxu0 0.0
    %150 = vmatpush1.msra.mxu0 0.0
    %151 = vmatprep.mubr.f32.mxu0 0.0
    %152 = vmatmul.mubr.f32.gmra.mrb[0].mxu0 %v64
    %v153 = vpop.f32.mrb[0].mxu0
    %v154 = vadd.f32 %v60, %v153
    %v155 = vpop.f32.mrb[0].mxu0
    %156 = vmatprep.mubr.f32.mxu0 0.0
    %157 = vmatmul.mubr.f32.gmra.mrb[0].mxu0 %v67
    %v158 = vpop.f32.mrb[0].mxu0
    %v159 = vadd.f32 %v60, %v158
    %v160 = vpop.f32.mrb[0].mxu0
    %161 = vmatprep.mubr.f32.mxu0 0.0
    %162 = vmatmul.mubr.f32.gmra.mrb[0].mxu0 %v70
    %v163 = vpop.f32.mrb[0].mxu0
    %v164 = vadd.f32 %v60, %v163
    %v165 = vpop.f32.mrb[0].mxu0
    %166 = vmatprep.mubr.f32.mxu0 0.0
    %167 = vmatmul.mubr.f32.gmra.mrb[0].mxu0 %v73
    %v168 = vpop.f32.mrb[0].mxu0
    %v169 = vadd.f32 %v60, %v168
    %v170 = vpop.f32.mrb[0].mxu0
    %171 = vmatprep.mubr.f32.mxu0 0.0
    %172 = vmatmul.mubr.f32.gmra.mrb[0].mxu0 %v76
    %v173 = vpop.f32.mrb[0].mxu0
    %v174 = vadd.f32 %v60, %v173
    %v175 = vpop.f32.mrb[0].mxu0
    %176 = vmatprep.mubr.f32.mxu0 0.0
    %177 = vmatmul.mubr.f32.gmra.mrb[0].mxu0 %v79
    %v178 = vpop.f32.mrb[0].mxu0
    %v179 = vadd.f32 %v60, %v178
    %v180 = vpop.f32.mrb[0].mxu0
    %181 = vmatprep.mubr.f32.mxu0 0.0
    %182 = vmatmul.mubr.f32.gmra.mrb[0].mxu0 %v82
    %v183 = vpop.f32.mrb[0].mxu0
    %v184 = vadd.f32 %v60, %v183
    %v185 = vpop.f32.mrb[0].mxu0
    %186 = vmatprep.mubr.f32.mxu0 0.0
    %187 = vmatmul.mubr.f32.gmra.mrb[0].mxu0 %v85
    %v188 = vpop.f32.mrb[0].mxu0
    %v189 = vadd.f32 %v60, %v188
    %v190 = vpop.f32.mrb[0].mxu0
    %191 = vdwg.mxu0
    %192 = vst [vmem:[#allocation7] sm:$0xff] %v154
    %193 = vst [vmem:[#allocation7 + $0x8] sm:$0xff] %v159
    %194 = vst [vmem:[#allocation7 + $0x10] sm:$0xff] %v164
    %195 = vst [vmem:[#allocation7 + $0x18] sm:$0xff] %v169
    %196 = vst [vmem:[#allocation7 + $0x20] sm:$0xff] %v174
    %197 = vst [vmem:[#allocation7 + $0x28] sm:$0xff] %v179
    %198 = vst [vmem:[#allocation7 + $0x30] sm:$0xff] %v184
    %199 = vst [vmem:[#allocation7 + $0x38] sm:$0xff] %v189
    // Predicated region
    $region22: #{tpu_custom_call.1} parent=1 // pred_check
      _
    $region23: #{tpu_custom_call.1} parent=1 // pred_check_branch
      %201 = sbr.rel (0) target = $region25
    $region24: #{tpu_custom_call.1} parent=1 // pred_region
      %s203 = ssub.s32 1024, 1024
      %204 = vsyncadd [#allocation4], %s203
      %s205 = sshll.u32 [#allocation7], 4
      %s206 = int_to_ptr.vmem [resolvable:$true] %s205
      %211 = dma.vmem_to_hbm [thread:$0]  %s206, 1024, %s3, [#allocation4], 128, 128, 8
    $region25: #{tpu_custom_call.1} parent=1 // pred_fallthru
      _
    // Predicated region
    $region26: #{tpu_custom_call.1} parent=1 // pred_check
      _
    $region27: #{tpu_custom_call.1} parent=1 // pred_check_branch
      %213 = sbr.rel (0) target = $region29
    $region28: #{tpu_custom_call.1} parent=1 // pred_region
      %214 = dma.done [#allocation4], 1024
    $region29: #{tpu_custom_call.1} parent=1 // pred_fallthru
      _
    %215 = vsyncpa [#allocation3], 1
    %216 = vsyncpa [#allocation6], 1
    %217 = vsyncpa [#allocation4], 1

</llo_original>
